<compile_context>
chip_gen: v5e
topology: v5e:2x2
jax: 0.10.0
libtpu: 0.0.40
codegen_flags: <defaults>
</compile_context>

<pallas_src>
import functools

import jax
import jax.numpy as jnp
from jax.experimental import pallas as pl
from jax.experimental.pallas import tpu as pltpu


_VMEM_BUFFER_BUDGET = 20 * 1024 * 1024   # bytes for all double-buffered blocks
_VMEM_LIMIT_BYTES = 32 * 1024 * 1024     # scoped VMEM limit (safe on v5e/v6e/v7x)


def _round_up(x, m):
    return -(-x // m) * m


def _focal_loss_kernel(logits_ref, targets_ref, out_ref, *, alpha, gamma):
    """Per-sample focal loss for one (TM, C) tile of logits."""
    x = logits_ref[...].astype(jnp.float32)        # (TM, C)  (bf16 upcast in-register)
    t = targets_ref[...]                           # (TM, 1)  int32
    tm, c = x.shape

    # --- numerically stable logsumexp pieces (lane reduce -> XLU, exp -> EUP)
    m = jnp.max(x, axis=-1, keepdims=True)         # (TM, 1)
    e = jnp.exp(x - m)                              # (TM, C)
    s = jnp.sum(e, axis=-1, keepdims=True)          # (TM, 1)

    # --- gather the target-class logit: one select + lane-reduce (no gather op
    # on TPU, no int->f32 convert, no extra (TM, C) multiply).
    class_ids = jax.lax.broadcasted_iota(jnp.int32, (tm, c), 1)
    tgt_logit = jnp.sum(jnp.where(class_ids == t, x, 0.0),
                        axis=-1, keepdims=True)     # (TM, 1)

    # ce = logsumexp - x_t ;  pt = exp(-ce)  (one cheap column exp; the second
    # (TM, C) multiply + lane-reduce of the previous revision is gone).
    ce = (jnp.log(s) + m) - tgt_logit               # (TM, 1)
    pt = jnp.exp(-ce)                                # (TM, 1)
    omp = 1.0 - pt

    # (1 - pt) ** gamma : integer-gamma fast path (square-and-multiply on VPU)
    # avoids exp(gamma * log(.)) on the single-issue EUP and NaNs at pt == 1.
    if float(gamma) == int(gamma) and 0 <= int(gamma) <= 16:
        gi = int(gamma)
        mod = None
        base = omp
        while gi > 0:
            if gi & 1:
                mod = base if mod is None else mod * base
            gi >>= 1
            if gi:
                base = base * base
        if mod is None:                              # gamma == 0
            mod = jnp.ones_like(omp)
    else:
        mod = jnp.power(omp, jnp.float32(gamma))

    out_ref[...] = (alpha * mod * ce).astype(out_ref.dtype)


def _choose_block_rows(n, c, itemsize):
    """Largest batch tile whose double-buffered blocks fit the VMEM budget."""
    sub = 16 if itemsize < 4 else 8                  # bf16 packs 16 rows / vreg
    c_pad = _round_up(max(c, 1), 128)                # lane dim pads to 128 in VMEM
    # Honest per-row VMEM bytes, double-buffered: logits tile + lane-sparse
    # (TM, 1) int32 targets (bloats to 128 lanes) + (TM, 1) f32 output.
    per_row = 2 * (c_pad * itemsize + 128 * 4 + 128 * 4)
    tm = _VMEM_BUFFER_BUDGET // per_row
    tm = max(sub, (tm // sub) * sub)
    tm = min(tm, _round_up(n, sub))
    # Prefer >= 2 grid steps (DMA/compute overlap; dual-TC sharding on v7x via
    # the "parallel" grid axis) when that still leaves >= ~1 MiB logits tiles.
    half = _round_up(-(-n // 2), sub)
    if half * c_pad * itemsize >= (1 << 20):
        tm = min(tm, half)
    return tm


def focal_loss(predictions, targets, *, alpha=1.0, gamma=2.0,
               reduction="mean", block_rows=None):
    """predictions: (N, C) float logits (f32 or bf16); targets: (N,) int ids."""
    n, c = predictions.shape
    itemsize = jnp.dtype(predictions.dtype).itemsize
    sub = 16 if itemsize < 4 else 8

    if block_rows is None:
        tm = _choose_block_rows(n, c, itemsize)
    else:
        tm = max(sub, (int(block_rows) // sub) * sub)

    num_tiles = pl.cdiv(n, tm)
    n_pad = num_tiles * tm

    # Only the tiny targets vector gets padded (the big logits array is NOT
    # padded; the ragged last block is handled by Pallas and sliced off below).
    tgt = targets.astype(jnp.int32)
    if n_pad != n:
        tgt = jnp.pad(tgt, (0, n_pad - n))
    targets_2d = tgt.reshape(n_pad, 1)

    kernel = functools.partial(
        _focal_loss_kernel, alpha=float(alpha), gamma=float(gamma)
    )

    per_sample = pl.pallas_call(
        kernel,
        out_shape=jax.ShapeDtypeStruct((n_pad, 1), jnp.float32),
        grid=(num_tiles,),
        in_specs=[
            pl.BlockSpec((tm, c), lambda i: (i, 0)),
            pl.BlockSpec((tm, 1), lambda i: (i, 0)),
        ],
        out_specs=pl.BlockSpec((tm, 1), lambda i: (i, 0)),
        compiler_params=pltpu.CompilerParams(
            dimension_semantics=("parallel",),   # independent tiles
            vmem_limit_bytes=_VMEM_LIMIT_BYTES,
        ),
        cost_estimate=pl.CostEstimate(
            flops=6 * n * c,
            transcendentals=n * (c + 2),
            bytes_accessed=n * c * itemsize + 2 * n * 4 + n * 4,
        ),
    )(predictions, targets_2d)

    per_sample = per_sample[:n, 0]
    if reduction == "mean":
        return jnp.mean(per_sample)
    elif reduction == "sum":
        return jnp.sum(per_sample)
    else:
        # Mirrors PyTorch: any other reduction returns the per-sample vector.
        return per_sample


def _reference_focal_loss(predictions, targets, alpha=1.0, gamma=2.0,
                          reduction="mean"):
    logits = predictions.astype(jnp.float32)
    lse = jax.nn.logsumexp(logits, axis=-1)
    tgt = jnp.take_along_axis(
        logits, targets[:, None].astype(jnp.int32), axis=-1)[:, 0]
    ce = lse - tgt
    pt = jnp.exp(-ce)
    fl = alpha * (1.0 - pt) ** gamma * ce
    if reduction == "mean":
        return jnp.mean(fl)
    elif reduction == "sum":
        return jnp.sum(fl)
    return fl


if __name__ == "__main__":
    key = jax.random.PRNGKey(0)
    k1, k2 = jax.random.split(key)

    N, C = 50, 32  # small shapes: 50 samples, 32 classes
    predictions = jax.random.normal(k1, (N, C), dtype=jnp.float32)
    targets = jax.random.randint(k2, (N,), 0, C, dtype=jnp.int32)

    # 1) default auto-tiled path (single ragged block, no logits pad), mean.
    loss = focal_loss(predictions, targets, alpha=1.0, gamma=2.0, reduction="mean")
    loss = jax.block_until_ready(loss)
    ref = _reference_focal_loss(predictions, targets, 1.0, 2.0, "mean")
    assert jnp.allclose(loss, ref, rtol=1e-5, atol=1e-6), (loss, ref)

    # 2) explicit multi-tile path (grid of 4 with ragged tail), sum reduction.
    loss_sum = focal_loss(predictions, targets, alpha=0.25, gamma=2.0,
                          reduction="sum", block_rows=16)
    loss_sum = jax.block_until_ready(loss_sum)
    ref_sum = _reference_focal_loss(predictions, targets, 0.25, 2.0, "sum")
    assert jnp.allclose(loss_sum, ref_sum, rtol=1e-5, atol=1e-5), (loss_sum, ref_sum)

    # 3) non-integer gamma, per-sample ('none') reduction.
    per = focal_loss(predictions, targets, alpha=1.0, gamma=1.5,
                     reduction="none", block_rows=16)
    per = jax.block_until_ready(per)
    ref_per = _reference_focal_loss(predictions, targets, 1.0, 1.5, "none")
    assert per.shape == (N,)
    assert jnp.allclose(per, ref_per, rtol=1e-5, atol=1e-6)

    # 4) bf16 logits path (halves HBM bytes of the dominant stream).
    pred_bf16 = predictions.astype(jnp.bfloat16)
    loss_bf16 = focal_loss(pred_bf16, targets, alpha=1.0, gamma=2.0)
    loss_bf16 = jax.block_until_ready(loss_bf16)
    ref_bf16 = _reference_focal_loss(pred_bf16.astype(jnp.float32), targets, 1.0, 2.0)
    assert jnp.allclose(loss_bf16, ref_bf16, rtol=5e-3, atol=5e-3), (loss_bf16, ref_bf16)

    print("KERNEL_OK")
</pallas_src>

<mosaic_0001>
module attributes {stable_mosaic.version = 11 : i64} {
  func.func @_focal_loss_kernel(%arg0: i32, %arg1: memref<56x32xf32, #tpu.memory_space<vmem>>, %arg2: memref<56x1xi32, #tpu.memory_space<vmem>>, %arg3: memref<56x1xf32, #tpu.memory_space<vmem>>) attributes {dimension_semantics = [#tpu.dimension_semantics<parallel>], iteration_bounds = array<i64: 1>, scalar_prefetch = 0 : i64, scratch_operands = 0 : i64, tpu.core_type = #tpu.core_type<tc>, window_params = [{transform_indices = @transform_0, window_bounds = array<i64: 56, 32>}, {transform_indices = @transform_1, window_bounds = array<i64: 56, 1>}, {transform_indices = @transform_2, window_bounds = array<i64: 56, 1>}]} {
    %c0 = arith.constant 0 : index
    %c0_0 = arith.constant 0 : index
    %0 = vector.load %arg1[%c0, %c0_0] : memref<56x32xf32, #tpu.memory_space<vmem>>, vector<56x32xf32>
    %c0_1 = arith.constant 0 : index
    %c0_2 = arith.constant 0 : index
    %1 = vector.load %arg2[%c0_1, %c0_2] : memref<56x1xi32, #tpu.memory_space<vmem>>, vector<56x1xi32>
    %cst = arith.constant dense<0xFF800000> : vector<56xf32>
    %2 = vector.multi_reduction <maximumf>, %0, %cst [1] : vector<56x32xf32> to vector<56xf32>
    %3 = vector.shape_cast %2 : vector<56xf32> to vector<56x1xf32>
    %4 = vector.broadcast %3 : vector<56x1xf32> to vector<56x32xf32>
    %5 = arith.subf %0, %4 : vector<56x32xf32>
    %6 = math.exp %5 : vector<56x32xf32>
    %cst_3 = arith.constant dense<0.000000e+00> : vector<56xf32>
    %7 = vector.multi_reduction <add>, %6, %cst_3 [1] : vector<56x32xf32> to vector<56xf32>
    %8 = vector.shape_cast %7 : vector<56xf32> to vector<56x1xf32>
    %9 = tpu.iota {dimensions = array<i32: 1>} : vector<56x32xi32>
    %10 = vector.broadcast %1 : vector<56x1xi32> to vector<56x32xi32>
    %11 = arith.cmpi eq, %9, %10 : vector<56x32xi32>
    %cst_4 = arith.constant 0.000000e+00 : f32
    %12 = vector.broadcast %cst_4 : f32 to vector<56x32xf32>
    %13 = arith.select %11, %0, %12 : vector<56x32xi1>, vector<56x32xf32>
    %cst_5 = arith.constant dense<0.000000e+00> : vector<56xf32>
    %14 = vector.multi_reduction <add>, %13, %cst_5 [1] : vector<56x32xf32> to vector<56xf32>
    %15 = vector.shape_cast %14 : vector<56xf32> to vector<56x1xf32>
    %16 = math.log %8 : vector<56x1xf32>
    %17 = arith.addf %16, %3 : vector<56x1xf32>
    %18 = arith.subf %17, %15 : vector<56x1xf32>
    %cst_6 = arith.constant 0.000000e+00 : f32
    %19 = vector.broadcast %cst_6 : f32 to vector<56x1xf32>
    %20 = arith.subf %19, %18 : vector<56x1xf32>
    %21 = math.exp %20 : vector<56x1xf32>
    %cst_7 = arith.constant 1.000000e+00 : f32
    %22 = vector.broadcast %cst_7 : f32 to vector<56x1xf32>
    %23 = arith.subf %22, %21 : vector<56x1xf32>
    %24 = arith.mulf %23, %23 : vector<56x1xf32>
    %cst_8 = arith.constant 1.000000e+00 : f32
    %25 = vector.broadcast %cst_8 : f32 to vector<56x1xf32>
    %26 = arith.mulf %25, %24 : vector<56x1xf32>
    %27 = arith.mulf %26, %18 : vector<56x1xf32>
    %c0_9 = arith.constant 0 : index
    %c0_10 = arith.constant 0 : index
    %28 = vector.load %arg3[%c0_9, %c0_10] : memref<56x1xf32, #tpu.memory_space<vmem>>, vector<56x1xf32>
    tpu.vector_store %arg3[%c0_9, %c0_10], %27 {strides = array<i32>} : memref<56x1xf32, #tpu.memory_space<vmem>>, vector<56x1xf32>,
    return
  }
  func.func @transform_0(%arg0: i32) -> (i32, i32) {
    %c0_i32 = arith.constant 0 : i32
    %c0_i32_0 = arith.constant 0 : i32
    return %arg0, %c0_i32 : i32, i32
  }
  func.func @transform_1(%arg0: i32) -> (i32, i32) {
    %c0_i32 = arith.constant 0 : i32
    %c0_i32_0 = arith.constant 0 : i32
    return %arg0, %c0_i32 : i32, i32
  }
  func.func @transform_2(%arg0: i32) -> (i32, i32) {
    %c0_i32 = arith.constant 0 : i32
    %c0_i32_0 = arith.constant 0 : i32
    return %arg0, %c0_i32 : i32, i32
  }
}

</mosaic_0001>

<llo_original>
// kernel: tpu_custom_call.1
$region0: #{tpu_custom_call.1}
  #allocation0 [shape = 'u32[]', space=smem, size = 0x4, offset = 0x4, fixed_abs, tag = 'smem constant byte address 0x4 - core index']
  #allocation1 [shape = 'u32[72,128]{1,0:T(1,128)}', space=vmem, size = 0x9000, scoped, tag = 'internal scratch']
  %s0 = inlined_call_operand.vmem [shape: f32[50,32], index: 0, kind: input, shape index: {}]
  %s1 = inlined_call_operand.vmem [shape: s32[56,1], index: 1, kind: input, shape index: {}]
  %s2 = inlined_call_operand.vmem [shape: f32[56,1], index: 2, kind: output, shape index: {}]
  %s3 = sld [smem:[#allocation0]]
  $region18: #{tpu_custom_call.1} parent=0
    _
  %s5 = ssub.s32 1, %s3
  %s6 = scalar_select 0, %s5, %s3
  // Predicated region
  $region2: #{tpu_custom_call.1} parent=0 // pred_check
    _
  $region3: #{tpu_custom_call.1} parent=0 // pred_check_branch
    %8 = sbr.rel (0) target = $region5
  $region4: #{tpu_custom_call.1} parent=0 // pred_region
    _
  $region5: #{tpu_custom_call.1} parent=0 // pred_fallthru
    _
  // Predicated region
  $region6: #{tpu_custom_call.1} parent=0 // pred_check
    _
  $region7: #{tpu_custom_call.1} parent=0 // pred_check_branch
    %10 = sbr.rel (0) target = $region9
  $region8: #{tpu_custom_call.1} parent=0 // pred_region
    _
  $region9: #{tpu_custom_call.1} parent=0 // pred_fallthru
    _
  %v11 = vld [vmem:[%s0] sm:$0xff]
  %v12 = vld [vmem:[%s0 + $0x8] sm:$0xff]
  %v13 = vld [vmem:[%s0 + $0x10] sm:$0xff]
  %v14 = vld [vmem:[%s0 + $0x18] sm:$0xff]
  %v15 = vld [vmem:[%s0 + $0x20] sm:$0xff]
  %v16 = vld [vmem:[%s0 + $0x28] sm:$0xff]
  %v17 = vld [vmem:[%s0 + $0x30] sm:$0xff]
  %v18 = vld [vmem:[%s1] sm:$0xff]
  %v19 = vld [vmem:[%s1 + $0x8] sm:$0xff]
  %v20 = vld [vmem:[%s1 + $0x10] sm:$0xff]
  %v21 = vld [vmem:[%s1 + $0x18] sm:$0xff]
  %v22 = vld [vmem:[%s1 + $0x20] sm:$0xff]
  %v23 = vld [vmem:[%s1 + $0x28] sm:$0xff]
  %v24 = vld [vmem:[%s1 + $0x30] sm:$0xff]
  %vm25 = vcmask 261120
  %v26 = vsel %vm25, %v11, -inf
  %27 = vmax.xlane.f32.xlu0 %v26
  %v28 = vpop.xlane.xlu0 %27
  %v29 = vsel %vm25, %v12, -inf
  %30 = vmax.xlane.f32.xlu0 %v29
  %v31 = vpop.xlane.xlu0 %30
  %v32 = vsel %vm25, %v13, -inf
  %33 = vmax.xlane.f32.xlu0 %v32
  %v34 = vpop.xlane.xlu0 %33
  %v35 = vsel %vm25, %v14, -inf
  %36 = vmax.xlane.f32.xlu0 %v35
  %v37 = vpop.xlane.xlu0 %36
  %v38 = vsel %vm25, %v15, -inf
  %39 = vmax.xlane.f32.xlu0 %v38
  %v40 = vpop.xlane.xlu0 %39
  %v41 = vsel %vm25, %v16, -inf
  %42 = vmax.xlane.f32.xlu0 %v41
  %v43 = vpop.xlane.xlu0 %42
  %v44 = vsel %vm25, %v17, -inf
  %45 = vmax.xlane.f32.xlu0 %v44
  %v46 = vpop.xlane.xlu0 %45
  %v47 = vsub.f32 %v11, %v28
  %v48 = vsub.f32 %v12, %v31
  %v49 = vsub.f32 %v13, %v34
  %v50 = vsub.f32 %v14, %v37
  %v51 = vsub.f32 %v15, %v40
  %v52 = vsub.f32 %v16, %v43
  %v53 = vsub.f32 %v17, %v46
  %v54 = vmul.f32 %v47, 1.442695
  %v55 = vpow.pop %v54
  %v56 = vmul.f32 %v48, 1.442695
  %v57 = vpow.pop %v56
  %v58 = vmul.f32 %v49, 1.442695
  %v59 = vpow.pop %v58
  %v60 = vmul.f32 %v50, 1.442695
  %v61 = vpow.pop %v60
  %v62 = vmul.f32 %v51, 1.442695
  %v63 = vpow.pop %v62
  %v64 = vmul.f32 %v52, 1.442695
  %v65 = vpow.pop %v64
  %v66 = vmul.f32 %v53, 1.442695
  %v67 = vpow.pop %v66
  %v68 = vsel %vm25, %v55, 0.0
  %69 = vadd.xlane.f32.xlu0 %v68
  %v70 = vpop.xlane.xlu0 %69
  %v71 = vsel %vm25, %v57, 0.0
  %72 = vadd.xlane.f32.xlu0 %v71
  %v73 = vpop.xlane.xlu0 %72
  %v74 = vsel %vm25, %v59, 0.0
  %75 = vadd.xlane.f32.xlu0 %v74
  %v76 = vpop.xlane.xlu0 %75
  %v77 = vsel %vm25, %v61, 0.0
  %78 = vadd.xlane.f32.xlu0 %v77
  %v79 = vpop.xlane.xlu0 %78
  %v80 = vsel %vm25, %v63, 0.0
  %81 = vadd.xlane.f32.xlu0 %v80
  %v82 = vpop.xlane.xlu0 %81
  %v83 = vsel %vm25, %v65, 0.0
  %84 = vadd.xlane.f32.xlu0 %v83
  %v85 = vpop.xlane.xlu0 %84
  %v86 = vsel %vm25, %v67, 0.0
  %87 = vadd.xlane.f32.xlu0 %v86
  %v88 = vpop.xlane.xlu0 %87
  %v89 = vlaneseq
  %v90 = vand.u32 %v89, 127
  %91 = vset.pattern.permute.xlu0 0
  %92 = vperm.xlu0 %91, %v18
  %v93 = vpop.permute.xlu0 %92
  %94 = vset.pattern.permute.xlu0 0
  %95 = vperm.xlu0 %94, %v19
  %v96 = vpop.permute.xlu0 %95
  %97 = vset.pattern.permute.xlu0 0
  %98 = vperm.xlu0 %97, %v20
  %v99 = vpop.permute.xlu0 %98
  %100 = vset.pattern.permute.xlu0 0
  %101 = vperm.xlu0 %100, %v21
  %v102 = vpop.permute.xlu0 %101
  %103 = vset.pattern.permute.xlu0 0
  %104 = vperm.xlu0 %103, %v22
  %v105 = vpop.permute.xlu0 %104
  %106 = vset.pattern.permute.xlu0 0
  %107 = vperm.xlu0 %106, %v23
  %v108 = vpop.permute.xlu0 %107
  %109 = vset.pattern.permute.xlu0 0
  %110 = vperm.xlu0 %109, %v24
  %v111 = vpop.permute.xlu0 %110
  %vm112 = vcmp.eq.s32.totalorder %v90, %v93
  %vm113 = vcmp.eq.s32.totalorder %v90, %v96
  %vm114 = vcmp.eq.s32.totalorder %v90, %v99
  %vm115 = vcmp.eq.s32.totalorder %v90, %v102
  %vm116 = vcmp.eq.s32.totalorder %v90, %v105
  %vm117 = vcmp.eq.s32.totalorder %v90, %v108
  %vm118 = vcmp.eq.s32.totalorder %v90, %v111
  %v119 = vsel %vm112, %v11, 0.0
  %v120 = vsel %vm113, %v12, 0.0
  %v121 = vsel %vm114, %v13, 0.0
  %v122 = vsel %vm115, %v14, 0.0
  %v123 = vsel %vm116, %v15, 0.0
  %v124 = vsel %vm117, %v16, 0.0
  %v125 = vsel %vm118, %v17, 0.0
  %v126 = vsel %vm25, %v119, 0.0
  %127 = vadd.xlane.f32.xlu0 %v126
  %v128 = vpop.xlane.xlu0 %127
  %v129 = vsel %vm25, %v120, 0.0
  %130 = vadd.xlane.f32.xlu0 %v129
  %v131 = vpop.xlane.xlu0 %130
  %v132 = vsel %vm25, %v121, 0.0
  %133 = vadd.xlane.f32.xlu0 %v132
  %v134 = vpop.xlane.xlu0 %133
  %v135 = vsel %vm25, %v122, 0.0
  %136 = vadd.xlane.f32.xlu0 %v135
  %v137 = vpop.xlane.xlu0 %136
  %v138 = vsel %vm25, %v123, 0.0
  %139 = vadd.xlane.f32.xlu0 %v138
  %v140 = vpop.xlane.xlu0 %139
  %v141 = vsel %vm25, %v124, 0.0
  %142 = vadd.xlane.f32.xlu0 %v141
  %v143 = vpop.xlane.xlu0 %142
  %v144 = vsel %vm25, %v125, 0.0
  %145 = vadd.xlane.f32.xlu0 %v144
  %v146 = vpop.xlane.xlu0 %145
  %v147 = vlog2.pop %v70
  %v148 = vmul.f32 %v147, 0.6931472
  %v149 = vlog2.pop %v73
  %v150 = vmul.f32 %v149, 0.6931472
  %v151 = vlog2.pop %v76
  %v152 = vmul.f32 %v151, 0.6931472
  %v153 = vlog2.pop %v79
  %v154 = vmul.f32 %v153, 0.6931472
  %v155 = vlog2.pop %v82
  %v156 = vmul.f32 %v155, 0.6931472
  %v157 = vlog2.pop %v85
  %v158 = vmul.f32 %v157, 0.6931472
  %v159 = vlog2.pop %v88
  %v160 = vmul.f32 %v159, 0.6931472
  %v161 = vadd.f32 %v148, %v28
  %v162 = vadd.f32 %v150, %v31
  %v163 = vadd.f32 %v152, %v34
  %v164 = vadd.f32 %v154, %v37
  %v165 = vadd.f32 %v156, %v40
  %v166 = vadd.f32 %v158, %v43
  %v167 = vadd.f32 %v160, %v46
  %v168 = vsub.f32 %v161, %v128
  %v169 = vsub.f32 %v162, %v131
  %v170 = vsub.f32 %v163, %v134
  %v171 = vsub.f32 %v164, %v137
  %v172 = vsub.f32 %v165, %v140
  %v173 = vsub.f32 %v166, %v143
  %v174 = vsub.f32 %v167, %v146
  %v175 = vsub.f32 0.0, %v168
  %v176 = vsub.f32 0.0, %v169
  %v177 = vsub.f32 0.0, %v170
  %v178 = vsub.f32 0.0, %v171
  %v179 = vsub.f32 0.0, %v172
  %v180 = vsub.f32 0.0, %v173
  %v181 = vsub.f32 0.0, %v174
  %v182 = vmul.f32 %v175, 1.442695
  %v183 = vpow.pop %v182
  %v184 = vmul.f32 %v176, 1.442695
  %v185 = vpow.pop %v184
  %v186 = vmul.f32 %v177, 1.442695
  %v187 = vpow.pop %v186
  %v188 = vmul.f32 %v178, 1.442695
  %v189 = vpow.pop %v188
  %v190 = vmul.f32 %v179, 1.442695
  %v191 = vpow.pop %v190
  %v192 = vmul.f32 %v180, 1.442695
  %v193 = vpow.pop %v192
  %v194 = vmul.f32 %v181, 1.442695
  %v195 = vpow.pop %v194
  %v196 = vsub.f32 1.0, %v183
  %v197 = vsub.f32 1.0, %v185
  %v198 = vsub.f32 1.0, %v187
  %v199 = vsub.f32 1.0, %v189
  %v200 = vsub.f32 1.0, %v191
  %v201 = vsub.f32 1.0, %v193
  %v202 = vsub.f32 1.0, %v195
  %v203 = vmul.f32 %v196, %v196
  %v204 = vmul.f32 %v197, %v197
  %v205 = vmul.f32 %v198, %v198
  %v206 = vmul.f32 %v199, %v199
  %v207 = vmul.f32 %v200, %v200
  %v208 = vmul.f32 %v201, %v201
  %v209 = vmul.f32 %v202, %v202
  %v210 = vmul.f32 %v203, %v168
  %v211 = vmul.f32 %v204, %v169
  %v212 = vmul.f32 %v205, %v170
  %v213 = vmul.f32 %v206, %v171
  %v214 = vmul.f32 %v207, %v172
  %v215 = vmul.f32 %v208, %v173
  %v216 = vmul.f32 %v209, %v174
  %vm217 = vcmask 7168
  %218 = vst.msk [vmem:[%s2] sm:$0xff] %vm217, %v210
  %219 = vst.msk [vmem:[%s2 + $0x8] sm:$0xff] %vm217, %v211
  %220 = vst.msk [vmem:[%s2 + $0x10] sm:$0xff] %vm217, %v212
  %221 = vst.msk [vmem:[%s2 + $0x18] sm:$0xff] %vm217, %v213
  %222 = vst.msk [vmem:[%s2 + $0x20] sm:$0xff] %vm217, %v214
  %223 = vst.msk [vmem:[%s2 + $0x28] sm:$0xff] %vm217, %v215
  %224 = vst.msk [vmem:[%s2 + $0x30] sm:$0xff] %vm217, %v216
  // Predicated region
  $region10: #{tpu_custom_call.1} parent=0 // pred_check
    _
  $region11: #{tpu_custom_call.1} parent=0 // pred_check_branch
    %226 = sbr.rel (0) target = $region13
  $region12: #{tpu_custom_call.1} parent=0 // pred_region
    _
  $region13: #{tpu_custom_call.1} parent=0 // pred_fallthru
    _
  // Predicated region
  $region14: #{tpu_custom_call.1} parent=0 // pred_check
    _
  $region15: #{tpu_custom_call.1} parent=0 // pred_check_branch
    %228 = sbr.rel (0) target = $region17
  $region16: #{tpu_custom_call.1} parent=0 // pred_region
    _
  $region17: #{tpu_custom_call.1} parent=0 // pred_fallthru
    _

</llo_original>
